<compile_context>
chip_gen: v6e
topology: v6e:2x2x1
jax: 0.10.0
libtpu: 0.0.40
codegen_flags: <defaults>
</compile_context>

<pallas_src>
import functools
import math

import jax
import jax.numpy as jnp
from jax.experimental import pallas as pl
from jax.experimental.pallas import tpu as pltpu

_NEG_BIG = -1e30  # finite "minus infinity": avoids -inf - -inf = NaN


# ----------------------------------------------------------------------------
# Kernel body
# ----------------------------------------------------------------------------
def _project(x_ref, w_ref, b_ref):
    """(bt, n, e_in) @ (e_in, e) + (1, e) -> (bt, n, e) f32 accumulation."""
    bt, n, e_in = x_ref.shape
    e_out = w_ref.shape[1]
    y = jnp.dot(x_ref[...].reshape(bt * n, e_in), w_ref[...],
                preferred_element_type=jnp.float32) + b_ref[...]
    return y.reshape(bt, n, e_out)


def _attention_core(q, k, v, mask, *, mxu_dtype, approx):
    """Scaled-dot-product attention on one block.

    q: (bt, nq, e) f32, ALREADY scaled by 1/sqrt(e) (folded into Wq/bq).
    k, v: (bt, nk, e) f32.  mask: (bt, 1 or nq, nk) int32, nonzero = keep
    (causal mask already folded in by the wrapper).
    """
    logits = jnp.einsum("bqe,bke->bqk",
                        q.astype(mxu_dtype), k.astype(mxu_dtype),
                        preferred_element_type=jnp.float32)
    logits = jnp.where(mask != 0, logits, _NEG_BIG)     # single fused select
    m = jnp.max(logits, axis=-1, keepdims=True)
    p = jnp.exp(logits - m)
    denom = jnp.sum(p, axis=-1, keepdims=True)
    w = p * pl.reciprocal(denom, approx=approx)
    return jnp.einsum("bqk,bke->bqe",
                      w.astype(mxu_dtype), v.astype(mxu_dtype),
                      preferred_element_type=jnp.float32)


def _make_attention_kernel(mode, *, mxu_dtype, approx):
    """mode in {'same', 'shared_kv', 'general'} selects how many activation
    inputs the kernel receives (deduped when x_q/x_k/x_v alias)."""

    def kernel(*refs):
        if mode == "same":
            (x_ref, mask_ref, wq_ref, bq_ref, wk_ref, bk_ref,
             wv_ref, bv_ref, o_ref) = refs
            xq_ref = xk_ref = xv_ref = x_ref
        elif mode == "shared_kv":
            (xq_ref, xkv_ref, mask_ref, wq_ref, bq_ref, wk_ref, bk_ref,
             wv_ref, bv_ref, o_ref) = refs
            xk_ref = xv_ref = xkv_ref
        else:
            (xq_ref, xk_ref, xv_ref, mask_ref, wq_ref, bq_ref, wk_ref,
             bk_ref, wv_ref, bv_ref, o_ref) = refs

        q = _project(xq_ref, wq_ref, bq_ref)
        k = _project(xk_ref, wk_ref, bk_ref)
        v = _project(xv_ref, wv_ref, bv_ref)
        out = _attention_core(q, k, v, mask_ref[...],
                              mxu_dtype=mxu_dtype, approx=approx)
        bt, n, e = out.shape
        # Lane-dense store: output block last dim is n*e (e.g. 256), so the
        # store is an unmasked vst instead of a 32/128-lane masked store.
        o_ref[...] = out.reshape(bt, n * e).astype(o_ref.dtype)

    return kernel


# ----------------------------------------------------------------------------
# Generation / VMEM aware tiling helpers
# ----------------------------------------------------------------------------
def _num_tensorcores():
    """2 TensorCores per chip on v7x, 1 on v5e/v6e.  Defensive: default 1."""
    try:
        kind = jax.devices()[0].device_kind.lower()
        if "v7" in kind or "7x" in kind:
            return 2
    except Exception:
        pass
    return 1


def _vmem_capacity_bytes():
    try:
        info = pltpu.get_tpu_info()
        cap = getattr(info, "vmem_capacity_bytes", None)
        if cap:
            return int(cap)
    except Exception:
        pass
    return 64 << 20  # conservative (v7x per-TC)


def _vmem_bytes_per_step(block_b, n_q, n_k, e, mask_rows, in_itemsize):
    """Rough per-grid-step VMEM budget: double-buffered ins/outs + f32
    intermediates (logits, p, w, q/k/v/out)."""
    acts_in = block_b * (n_q + 2 * n_k) * e * in_itemsize
    mask_in = block_b * mask_rows * n_k * 4
    out = block_b * n_q * e * 4
    weights = 3 * e * e * in_itemsize + 3 * e * 4
    inter = block_b * (3 * n_q * n_k * 4 + (2 * n_q + 2 * n_k) * e * 4)
    return 2 * (acts_in + mask_in + out) + 2 * weights + inter


def _pick_block_b(B, n_q, n_k, e, mask_rows, *, in_itemsize, num_tc,
                  vmem_budget):
    """Batch elements per grid step.  1-TC chips (v5e/v6e): use the largest
    block that fits VMEM (grid of 1 => one ~0.35us step).  2-TC chips (v7x):
    keep >= 2 parallel grid steps when B >= 2."""
    if n_q % 8:
        return 1  # keep the in-kernel (bt, n, e) -> (bt*n, e) merge tile-aligned
    best = 1
    for cand in range(1, B + 1):
        if B % cand:
            continue
        if _vmem_bytes_per_step(cand, n_q, n_k, e, mask_rows,
                                in_itemsize) > vmem_budget:
            continue
        if num_tc > 1 and B >= num_tc and B // cand < num_tc:
            continue
        best = cand
    return best


# ----------------------------------------------------------------------------
# Wrapper
# ----------------------------------------------------------------------------
def self_attention_head(x_q, x_k, x_v, attn_mask,
                        wq, bq, wk, bk, wv, bv,
                        *, mask_future=False, block_b=None,
                        mxu_dtype=jnp.float32, approx_softmax=False):
    """Pallas TPU implementation of SelfAttentionHead.forward.

    x_q: (B, N_q, E); x_k, x_v: (B, N_k, E); attn_mask: (B, N_k), nonzero=keep.
    wq/wk/wv: (E, E) stored as torch_weight.T (kernel computes x @ W + b);
    bq/bk/bv: (E,).  mxu_dtype=jnp.bfloat16 halves activation/weight DMA and
    uses the native bf16 MXU on ALL generations (v5e/v6e/v7x); f32
    accumulation is kept.  Default f32 for exact parity.
    """
    B, n_q, E = x_q.shape
    n_k = x_k.shape[1]
    out_dtype = x_q.dtype

    # Check aliasing BEFORE any casting (casting may break identity).
    same_qkv = (x_q is x_k) and (x_k is x_v)
    shared_kv = (x_k is x_v) and not same_qkv
    mode = "same" if same_qkv else ("shared_kv" if shared_kv else "general")

    # Fold 1/sqrt(d) into the q projection (constant work on the small params
    # instead of a divide over the (N_q, N_k) logits tile).
    inv_scale = 1.0 / math.sqrt(E)
    wq_s = (wq.astype(jnp.float32) * inv_scale)
    bq_s = (bq.astype(jnp.float32) * inv_scale)

    # HBM-side casts (no per-step VALU casts, half DMA bytes when bf16).
    in_itemsize = jnp.dtype(mxu_dtype).itemsize
    xq_c = x_q.astype(mxu_dtype)
    xk_c = x_k.astype(mxu_dtype)
    xv_c = x_v.astype(mxu_dtype)
    wq_c = wq_s.astype(mxu_dtype)
    wk_c = wk.astype(mxu_dtype)
    wv_c = wv.astype(mxu_dtype)
    bq_2 = bq_s.reshape(1, E).astype(jnp.float32)
    bk_2 = bk.reshape(1, E).astype(jnp.float32)
    bv_2 = bv.reshape(1, E).astype(jnp.float32)

    # Causal + padding folded into ONE precomputed int32 mask (nonzero=keep):
    # hoists the per-step iota/compare/AND out of the kernel body.
    keep = (attn_mask != 0)[:, None, :]                       # (B, 1, n_k)
    if mask_future:
        causal = jnp.tril(jnp.ones((n_q, n_k), jnp.int32)) != 0
        mask_i32 = (keep & causal[None]).astype(jnp.int32)    # (B, n_q, n_k)
    else:
        mask_i32 = keep.astype(jnp.int32)                     # (B, 1, n_k)
    mask_rows = mask_i32.shape[1]

    # Generation-aware tiling.
    num_tc = _num_tensorcores()
    vmem_cap = _vmem_capacity_bytes()
    vmem_budget = min(vmem_cap // 2, 48 << 20)
    if block_b is None:
        block_b = _pick_block_b(B, n_q, n_k, E, mask_rows,
                                in_itemsize=in_itemsize, num_tc=num_tc,
                                vmem_budget=vmem_budget)
    assert B % block_b == 0, "block_b must divide the batch size"
    grid = (B // block_b,)

    # Explicit scoped-VMEM limit (default scoped is 16/32 MiB, well below
    # physical); generous headroom over the per-step estimate, capped for v7x.
    est = _vmem_bytes_per_step(block_b, n_q, n_k, E, mask_rows, in_itemsize)
    vmem_limit = int(min(max(4 * est, 16 << 20), 48 << 20))

    kernel = _make_attention_kernel(mode, mxu_dtype=mxu_dtype,
                                    approx=approx_softmax)

    act_spec_q = pl.BlockSpec((block_b, n_q, E), lambda b: (b, 0, 0))
    act_spec_k = pl.BlockSpec((block_b, n_k, E), lambda b: (b, 0, 0))
    mask_spec = pl.BlockSpec((block_b, mask_rows, n_k), lambda b: (b, 0, 0))
    w_spec = pl.BlockSpec((E, E), lambda b: (0, 0))
    b_spec = pl.BlockSpec((1, E), lambda b: (0, 0))

    if mode == "same":
        inputs = [xq_c, mask_i32, wq_c, bq_2, wk_c, bk_2, wv_c, bv_2]
        in_specs = [act_spec_q, mask_spec,
                    w_spec, b_spec, w_spec, b_spec, w_spec, b_spec]
    elif mode == "shared_kv":
        inputs = [xq_c, xk_c, mask_i32, wq_c, bq_2, wk_c, bk_2, wv_c, bv_2]
        in_specs = [act_spec_q, act_spec_k, mask_spec,
                    w_spec, b_spec, w_spec, b_spec, w_spec, b_spec]
    else:
        inputs = [xq_c, xk_c, xv_c, mask_i32, wq_c, bq_2, wk_c, bk_2,
                  wv_c, bv_2]
        in_specs = [act_spec_q, act_spec_k, act_spec_k, mask_spec,
                    w_spec, b_spec, w_spec, b_spec, w_spec, b_spec]

    out_bytes = B * n_q * E * jnp.dtype(out_dtype).itemsize
    cost = pl.CostEstimate(
        flops=2 * B * ((n_q + 2 * n_k) * E * E + 2 * n_q * n_k * E),
        transcendentals=B * n_q * (n_k + 1),
        bytes_accessed=int(sum(int(a.size) * a.dtype.itemsize for a in inputs)
                           + out_bytes))

    # Lane-dense output: (B, n_q*E) — reshaped back to (B, n_q, E) below.
    out2d = pl.pallas_call(
        kernel,
        out_shape=jax.ShapeDtypeStruct((B, n_q * E), out_dtype),
        grid=grid,
        in_specs=in_specs,
        out_specs=pl.BlockSpec((block_b, n_q * E), lambda b: (b, 0)),
        compiler_params=pltpu.CompilerParams(
            dimension_semantics=("parallel",),
            vmem_limit_bytes=vmem_limit),
        cost_estimate=cost,
    )(*inputs)
    return out2d.reshape(B, n_q, E)


# ----------------------------------------------------------------------------
# Pure-JAX reference (mirrors the PyTorch module)
# ----------------------------------------------------------------------------
def _reference(x_q, x_k, x_v, attn_mask, wq, bq, wk, bk, wv, bv, mask_future):
    q = x_q @ wq + bq
    k = x_k @ wk + bk
    v = x_v @ wv + bv
    d = q.shape[-1]
    logits = jnp.einsum("bqe,bke->bqk", q, k) / jnp.sqrt(jnp.float32(d))
    if mask_future:
        n_q, n_k = q.shape[1], k.shape[1]
        tri = jnp.tril(jnp.ones((n_q, n_k)))
        logits = jnp.where(tri == 0, -jnp.inf, logits)
    logits = jnp.where(attn_mask[:, None, :] == 0, -jnp.inf, logits)
    w = jax.nn.softmax(logits, axis=-1)
    return jnp.einsum("bqk,bke->bqe", w, v)


if __name__ == "__main__":
    B, N, E = 2, 8, 32
    NK_CROSS = 16

    key = jax.random.PRNGKey(0)
    (k_x, k_xk, k_xv, k_xqc, k_xkc, k_xvc,
     k_wq, k_wk, k_wv, k_bq, k_bk, k_bv) = jax.random.split(key, 12)

    x = jax.random.normal(k_x, (B, N, E), jnp.float32)
    x_k2 = jax.random.normal(k_xk, (B, N, E), jnp.float32)
    x_v2 = jax.random.normal(k_xv, (B, N, E), jnp.float32)
    xq_c = jax.random.normal(k_xqc, (B, N, E), jnp.float32)
    xk_c = jax.random.normal(k_xkc, (B, NK_CROSS, E), jnp.float32)
    xv_c = jax.random.normal(k_xvc, (B, NK_CROSS, E), jnp.float32)

    # Padding masks (1 = keep, 0 = masked).
    attn_mask = jnp.ones((B, N), jnp.float32).at[1, N - 3:].set(0.0)
    attn_mask_c = jnp.ones((B, NK_CROSS), jnp.float32).at[0, NK_CROSS - 4:].set(0.0)

    # nn.Linear(embed_dim, embed_dim) style params, stored as torch_weight.T.
    s = 1.0 / math.sqrt(E)
    wq = jax.random.uniform(k_wq, (E, E), jnp.float32, -s, s)
    wk = jax.random.uniform(k_wk, (E, E), jnp.float32, -s, s)
    wv = jax.random.uniform(k_wv, (E, E), jnp.float32, -s, s)
    bq = jax.random.uniform(k_bq, (E,), jnp.float32, -s, s)
    bk = jax.random.uniform(k_bk, (E,), jnp.float32, -s, s)
    bv = jax.random.uniform(k_bv, (E,), jnp.float32, -s, s)

    params = (wq, bq, wk, bk, wv, bv)
    TOL = dict(atol=1e-4, rtol=1e-4)   # exact softmax reciprocal, f32 MXU path

    # 1) Pure self-attention (shared x) + causal mask.
    out1 = jax.block_until_ready(
        self_attention_head(x, x, x, attn_mask, *params, mask_future=True))
    ref1 = _reference(x, x, x, attn_mask, *params, mask_future=True)
    assert out1.shape == (B, N, E)
    assert jnp.allclose(out1, ref1, **TOL), "mismatch: fused self-attention"

    # 2) Distinct q/k/v, N_q == N_k (separate activation inputs, no concat).
    out2 = jax.block_until_ready(
        self_attention_head(x, x_k2, x_v2, attn_mask, *params,
                            mask_future=False))
    ref2 = _reference(x, x_k2, x_v2, attn_mask, *params, mask_future=False)
    assert jnp.allclose(out2, ref2, **TOL), "mismatch: distinct q/k/v"

    # 3) Cross-attention N_q != N_k.
    out3 = jax.block_until_ready(
        self_attention_head(xq_c, xk_c, xv_c, attn_mask_c, *params,
                            mask_future=False))
    ref3 = _reference(xq_c, xk_c, xv_c, attn_mask_c, *params,
                      mask_future=False)
    assert out3.shape == (B, N, E)
    assert jnp.allclose(out3, ref3, **TOL), "mismatch: cross-attention"

    print("KERNEL_OK")
</pallas_src>

<mosaic_0001>
module attributes {stable_mosaic.version = 11 : i64} {
  func.func @kernel(%arg0: i32, %arg1: memref<2x8x32xf32, #tpu.memory_space<vmem>>, %arg2: memref<2x8x8xi32, #tpu.memory_space<vmem>>, %arg3: memref<32x32xf32, #tpu.memory_space<vmem>>, %arg4: memref<1x32xf32, #tpu.memory_space<vmem>>, %arg5: memref<32x32xf32, #tpu.memory_space<vmem>>, %arg6: memref<1x32xf32, #tpu.memory_space<vmem>>, %arg7: memref<32x32xf32, #tpu.memory_space<vmem>>, %arg8: memref<1x32xf32, #tpu.memory_space<vmem>>, %arg9: memref<2x256xf32, #tpu.memory_space<vmem>>) attributes {dimension_semantics = [#tpu.dimension_semantics<parallel>], iteration_bounds = array<i64: 1>, scalar_prefetch = 0 : i64, scratch_operands = 0 : i64, tpu.core_type = #tpu.core_type<tc>, window_params = [{transform_indices = @transform_0, window_bounds = array<i64: 2, 8, 32>}, {transform_indices = @transform_1, window_bounds = array<i64: 2, 8, 8>}, {pipeline_mode = #tpu.pipeline_mode<synchronous>, transform_indices = @transform_2, window_bounds = array<i64: 32, 32>}, {pipeline_mode = #tpu.pipeline_mode<synchronous>, transform_indices = @transform_3, window_bounds = array<i64: 1, 32>}, {pipeline_mode = #tpu.pipeline_mode<synchronous>, transform_indices = @transform_4, window_bounds = array<i64: 32, 32>}, {pipeline_mode = #tpu.pipeline_mode<synchronous>, transform_indices = @transform_5, window_bounds = array<i64: 1, 32>}, {pipeline_mode = #tpu.pipeline_mode<synchronous>, transform_indices = @transform_6, window_bounds = array<i64: 32, 32>}, {pipeline_mode = #tpu.pipeline_mode<synchronous>, transform_indices = @transform_7, window_bounds = array<i64: 1, 32>}, {transform_indices = @transform_8, window_bounds = array<i64: 2, 256>}]} {
    %c0 = arith.constant 0 : index
    %c0_0 = arith.constant 0 : index
    %c0_1 = arith.constant 0 : index
    %0 = vector.load %arg1[%c0, %c0_0, %c0_1] : memref<2x8x32xf32, #tpu.memory_space<vmem>>, vector<2x8x32xf32>
    %1 = vector.shape_cast %0 : vector<2x8x32xf32> to vector<16x32xf32>
    %c0_2 = arith.constant 0 : index
    %c0_3 = arith.constant 0 : index
    %2 = vector.load %arg3[%c0_2, %c0_3] : memref<32x32xf32, #tpu.memory_space<vmem>>, vector<32x32xf32>
    %cst = arith.constant dense<0.000000e+00> : vector<16x32xf32>
    %3 = tpu.matmul %1, %2, %cst {dimension_numbers = #tpu.dot_dimension_numbers<[1], [0], [0], [1], [0, 0, 1, 1], [], []>} : vector<16x32xf32>, vector<32x32xf32>, vector<16x32xf32> -> vector<16x32xf32>
    %c0_4 = arith.constant 0 : index
    %c0_5 = arith.constant 0 : index
    %4 = vector.load %arg4[%c0_4, %c0_5] : memref<1x32xf32, #tpu.memory_space<vmem>>, vector<1x32xf32>
    %5 = vector.broadcast %4 : vector<1x32xf32> to vector<16x32xf32>
    %6 = arith.addf %3, %5 : vector<16x32xf32>
    %7 = vector.shape_cast %6 : vector<16x32xf32> to vector<2x8x32xf32>
    %c0_6 = arith.constant 0 : index
    %c0_7 = arith.constant 0 : index
    %c0_8 = arith.constant 0 : index
    %8 = vector.load %arg1[%c0_6, %c0_7, %c0_8] : memref<2x8x32xf32, #tpu.memory_space<vmem>>, vector<2x8x32xf32>
    %9 = vector.shape_cast %8 : vector<2x8x32xf32> to vector<16x32xf32>
    %c0_9 = arith.constant 0 : index
    %c0_10 = arith.constant 0 : index
    %10 = vector.load %arg5[%c0_9, %c0_10] : memref<32x32xf32, #tpu.memory_space<vmem>>, vector<32x32xf32>
    %cst_11 = arith.constant dense<0.000000e+00> : vector<16x32xf32>
    %11 = tpu.matmul %9, %10, %cst_11 {dimension_numbers = #tpu.dot_dimension_numbers<[1], [0], [0], [1], [0, 0, 1, 1], [], []>} : vector<16x32xf32>, vector<32x32xf32>, vector<16x32xf32> -> vector<16x32xf32>
    %c0_12 = arith.constant 0 : index
    %c0_13 = arith.constant 0 : index
    %12 = vector.load %arg6[%c0_12, %c0_13] : memref<1x32xf32, #tpu.memory_space<vmem>>, vector<1x32xf32>
    %13 = vector.broadcast %12 : vector<1x32xf32> to vector<16x32xf32>
    %14 = arith.addf %11, %13 : vector<16x32xf32>
    %15 = vector.shape_cast %14 : vector<16x32xf32> to vector<2x8x32xf32>
    %c0_14 = arith.constant 0 : index
    %c0_15 = arith.constant 0 : index
    %c0_16 = arith.constant 0 : index
    %16 = vector.load %arg1[%c0_14, %c0_15, %c0_16] : memref<2x8x32xf32, #tpu.memory_space<vmem>>, vector<2x8x32xf32>
    %17 = vector.shape_cast %16 : vector<2x8x32xf32> to vector<16x32xf32>
    %c0_17 = arith.constant 0 : index
    %c0_18 = arith.constant 0 : index
    %18 = vector.load %arg7[%c0_17, %c0_18] : memref<32x32xf32, #tpu.memory_space<vmem>>, vector<32x32xf32>
    %cst_19 = arith.constant dense<0.000000e+00> : vector<16x32xf32>
    %19 = tpu.matmul %17, %18, %cst_19 {dimension_numbers = #tpu.dot_dimension_numbers<[1], [0], [0], [1], [0, 0, 1, 1], [], []>} : vector<16x32xf32>, vector<32x32xf32>, vector<16x32xf32> -> vector<16x32xf32>
    %c0_20 = arith.constant 0 : index
    %c0_21 = arith.constant 0 : index
    %20 = vector.load %arg8[%c0_20, %c0_21] : memref<1x32xf32, #tpu.memory_space<vmem>>, vector<1x32xf32>
    %21 = vector.broadcast %20 : vector<1x32xf32> to vector<16x32xf32>
    %22 = arith.addf %19, %21 : vector<16x32xf32>
    %23 = vector.shape_cast %22 : vector<16x32xf32> to vector<2x8x32xf32>
    %c0_22 = arith.constant 0 : index
    %c0_23 = arith.constant 0 : index
    %c0_24 = arith.constant 0 : index
    %24 = vector.load %arg2[%c0_22, %c0_23, %c0_24] : memref<2x8x8xi32, #tpu.memory_space<vmem>>, vector<2x8x8xi32>
    "tpu.trace_start"() <{level = 10 : i32, message = "bqe,bke->bqk"}> : () -> ()
    %cst_25 = arith.constant dense<0.000000e+00> : vector<2x8x8xf32>
    %25 = tpu.matmul %7, %15, %cst_25 {dimension_numbers = #tpu.dot_dimension_numbers<[2], [2], [1], [1], [0, 0, 0, 1, 1, 1], [0], [0]>} : vector<2x8x32xf32>, vector<2x8x32xf32>, vector<2x8x8xf32> -> vector<2x8x8xf32>
    %c0_i32 = arith.constant 0 : i32
    "tpu.trace_stop"() : () -> ()
    %26 = vector.broadcast %c0_i32 : i32 to vector<2x8x8xi32>
    %27 = arith.cmpi ne, %24, %26 : vector<2x8x8xi32>
    %cst_26 = arith.constant -1.000000e+30 : f32
    %28 = vector.broadcast %cst_26 : f32 to vector<2x8x8xf32>
    %29 = arith.select %27, %25, %28 : vector<2x8x8xi1>, vector<2x8x8xf32>
    %cst_27 = arith.constant dense<0xFF800000> : vector<2x8xf32>
    %30 = vector.multi_reduction <maximumf>, %29, %cst_27 [2] : vector<2x8x8xf32> to vector<2x8xf32>
    %31 = vector.shape_cast %30 : vector<2x8xf32> to vector<2x8x1xf32>
    %32 = vector.broadcast %31 : vector<2x8x1xf32> to vector<2x8x8xf32>
    %33 = arith.subf %29, %32 : vector<2x8x8xf32>
    %34 = math.exp %33 : vector<2x8x8xf32>
    %cst_28 = arith.constant dense<0.000000e+00> : vector<2x8xf32>
    %35 = vector.multi_reduction <add>, %34, %cst_28 [2] : vector<2x8x8xf32> to vector<2x8xf32>
    %36 = vector.shape_cast %35 : vector<2x8xf32> to vector<2x8x1xf32>
    %37 = tpu.reciprocal %36 : vector<2x8x1xf32> -> vector<2x8x1xf32>
    %38 = vector.broadcast %37 : vector<2x8x1xf32> to vector<2x8x8xf32>
    %39 = arith.mulf %34, %38 : vector<2x8x8xf32>
    "tpu.trace_start"() <{level = 10 : i32, message = "bqk,bke->bqe"}> : () -> ()
    %cst_29 = arith.constant dense<0.000000e+00> : vector<2x8x32xf32>
    %40 = tpu.matmul %39, %23, %cst_29 {dimension_numbers = #tpu.dot_dimension_numbers<[2], [1], [1], [2], [0, 0, 0, 1, 1, 2], [0], [0]>} : vector<2x8x8xf32>, vector<2x8x32xf32>, vector<2x8x32xf32> -> vector<2x8x32xf32>
    "tpu.trace_stop"() : () -> ()
    %41 = vector.shape_cast %40 : vector<2x8x32xf32> to vector<2x256xf32>
    %c0_30 = arith.constant 0 : index
    %c0_31 = arith.constant 0 : index
    %42 = vector.load %arg9[%c0_30, %c0_31] : memref<2x256xf32, #tpu.memory_space<vmem>>, vector<2x256xf32>
    tpu.vector_store %arg9[%c0_30, %c0_31], %41 {strides = array<i32>} : memref<2x256xf32, #tpu.memory_space<vmem>>, vector<2x256xf32>,
    return
  }
  func.func @transform_0(%arg0: i32) -> (i32, i32, i32) {
    %c0_i32 = arith.constant 0 : i32
    %c0_i32_0 = arith.constant 0 : i32
    %c0_i32_1 = arith.constant 0 : i32
    return %arg0, %c0_i32, %c0_i32_0 : i32, i32, i32
  }
  func.func @transform_1(%arg0: i32) -> (i32, i32, i32) {
    %c0_i32 = arith.constant 0 : i32
    %c0_i32_0 = arith.constant 0 : i32
    %c0_i32_1 = arith.constant 0 : i32
    return %arg0, %c0_i32, %c0_i32_0 : i32, i32, i32
  }
  func.func @transform_2(%arg0: i32) -> (i32, i32) {
    %c0_i32 = arith.constant 0 : i32
    %c0_i32_0 = arith.constant 0 : i32
    %c0_i32_1 = arith.constant 0 : i32
    return %c0_i32, %c0_i32_0 : i32, i32
  }
  func.func @transform_3(%arg0: i32) -> (i32, i32) {
    %c0_i32 = arith.constant 0 : i32
    %c0_i32_0 = arith.constant 0 : i32
    %c0_i32_1 = arith.constant 0 : i32
    return %c0_i32, %c0_i32_0 : i32, i32
  }
  func.func @transform_4(%arg0: i32) -> (i32, i32) {
    %c0_i32 = arith.constant 0 : i32
    %c0_i32_0 = arith.constant 0 : i32
    %c0_i32_1 = arith.constant 0 : i32
    return %c0_i32, %c0_i32_0 : i32, i32
  }
  func.func @transform_5(%arg0: i32) -> (i32, i32) {
    %c0_i32 = arith.constant 0 : i32
    %c0_i32_0 = arith.constant 0 : i32
    %c0_i32_1 = arith.constant 0 : i32
    return %c0_i32, %c0_i32_0 : i32, i32
  }
  func.func @transform_6(%arg0: i32) -> (i32, i32) {
    %c0_i32 = arith.constant 0 : i32
    %c0_i32_0 = arith.constant 0 : i32
    %c0_i32_1 = arith.constant 0 : i32
    return %c0_i32, %c0_i32_0 : i32, i32
  }
  func.func @transform_7(%arg0: i32) -> (i32, i32) {
    %c0_i32 = arith.constant 0 : i32
    %c0_i32_0 = arith.constant 0 : i32
    %c0_i32_1 = arith.constant 0 : i32
    return %c0_i32, %c0_i32_0 : i32, i32
  }
  func.func @transform_8(%arg0: i32) -> (i32, i32) {
    %c0_i32 = arith.constant 0 : i32
    %c0_i32_0 = arith.constant 0 : i32
    return %arg0, %c0_i32 : i32, i32
  }
}

</mosaic_0001>

<llo_original>
// kernel: tpu_custom_call.1
$region0: #{tpu_custom_call.1}
  #allocation0 [shape = 'u32[]', space=smem, size = 0x4, offset = 0x4, fixed_abs, tag = 'smem constant byte address 0x4 - core index']
  #allocation1 [shape = 'u32[144,128]{1,0:T(1,128)}', space=vmem, size = 0x12000, scoped, tag = 'internal scratch']
  %s0 = inlined_call_operand.hbm [shape: f32[2,8,32], index: 0, kind: input, shape index: {}]
  %s1 = inlined_call_operand.hbm [shape: s32[2,8,8], index: 1, kind: input, shape index: {}]
  %s2 = inlined_call_operand.hbm [shape: f32[32,32], index: 2, kind: input, shape index: {}]
  %s3 = inlined_call_operand.vmem [shape: f32[1,32], index: 3, kind: input, shape index: {}]
  %s4 = inlined_call_operand.hbm [shape: f32[32,32], index: 4, kind: input, shape index: {}]
  %s5 = inlined_call_operand.vmem [shape: f32[1,32], index: 5, kind: input, shape index: {}]
  %s6 = inlined_call_operand.hbm [shape: f32[32,32], index: 6, kind: input, shape index: {}]
  %s7 = inlined_call_operand.vmem [shape: f32[1,32], index: 7, kind: input, shape index: {}]
  %s8 = inlined_call_operand.hbm [shape: f32[2,256], index: 8, kind: output, shape index: {}]
  %s9 = sld [smem:[#allocation0]]
  $region62: #{tpu_custom_call.1} parent=0
    _
  %s11 = ssub.s32 1, %s9
  %s12 = scalar_select 0, %s11, %s9
  $region1: #{tpu_custom_call.1} parent=0
    #allocation2 [shape = 'u8[8192]{0}', space=vmem, size = 0x2000, scoped, tag = 'input window, operand 0, single buffered']
    #allocation3 [shape = 's32[1]{0}', space=sflag, size = 0x4, scoped, tag = 'scoped memory for tpu_custom_call.1']
    #allocation4 [shape = 's32[1]{0}', space=sflag, size = 0x4, scoped, tag = 'scoped memory for tpu_custom_call.1']
    #allocation5 [shape = 'u8[8192]{0}', space=vmem, size = 0x2000, scoped, tag = 'input window, operand 1, single buffered']
    #allocation6 [shape = 's32[1]{0}', space=sflag, size = 0x4, scoped, tag = 'scoped memory for tpu_custom_call.1']
    #allocation7 [shape = 'u8[16384]{0}', space=vmem, size = 0x4000, scoped, tag = 'input window, operand 2, single buffered']
    #allocation8 [shape = 'u8[16384]{0}', space=vmem, size = 0x4000, scoped, tag = 'input window, operand 4, single buffered']
    #allocation9 [shape = 's32[1]{0}', space=sflag, size = 0x4, scoped, tag = 'scoped memory for tpu_custom_call.1']
    #allocation10 [shape = 'u8[16384]{0}', space=vmem, size = 0x4000, scoped, tag = 'input window, operand 6, single buffered']
    #allocation11 [shape = 'u8[2048]{0}', space=vmem, size = 0x800, scoped, tag = 'output window, operand 0, single buffered']
    %13 = vsyncpa [#allocation3], 0
    %14 = vsyncpa [#allocation6], 0
    %15 = vsyncpa [#allocation9], 0
    %16 = vsyncpa [#allocation4], 0
    // Predicated region
    $region2: #{tpu_custom_call.1} parent=1 // pred_check
      _
    $region3: #{tpu_custom_call.1} parent=1 // pred_check_branch
      %18 = sbr.rel (0) target = $region5
    $region4: #{tpu_custom_call.1} parent=1 // pred_region
      %s20 = ssub.s32 256, 256
      %21 = vsyncadd [#allocation3], %s20
      %s22 = sshll.u32 [#allocation2], 4
      %s23 = int_to_ptr.vmem [resolvable:$true] %s22
      %28 = dma.hbm_to_vmem [thread:$0]  %s0, 256, %s23, [#allocation3], 128, 128, 8
    $region5: #{tpu_custom_call.1} parent=1 // pred_fallthru
      _
    // Predicated region
    $region6: #{tpu_custom_call.1} parent=1 // pred_check
      _
    $region7: #{tpu_custom_call.1} parent=1 // pred_check_branch
      %30 = sbr.rel (0) target = $region9
    $region8: #{tpu_custom_call.1} parent=1 // pred_region
      %s32 = ssub.s32 256, 256
      %33 = vsyncadd [#allocation6], %s32
      %s34 = sshll.u32 [#allocation5], 4
      %s35 = int_to_ptr.vmem [resolvable:$true] %s34
      %40 = dma.hbm_to_vmem [thread:$0]  %s1, 256, %s35, [#allocation6], 128, 128, 8
    $region9: #{tpu_custom_call.1} parent=1 // pred_fallthru
      _
    // Predicated region
    $region10: #{tpu_custom_call.1} parent=1 // pred_check
      _
    $region11: #{tpu_custom_call.1} parent=1 // pred_check_branch
      %42 = sbr.rel (0) target = $region13
    $region12: #{tpu_custom_call.1} parent=1 // pred_region
      %s44 = ssub.s32 512, 512
      %45 = vsyncadd [#allocation6], %s44
      %s46 = sshll.u32 [#allocation7], 4
      %s47 = int_to_ptr.vmem [resolvable:$true] %s46
      %52 = dma.hbm_to_vmem [thread:$0]  %s2, 512, %s47, [#allocation6], 128, 128, 8
    $region13: #{tpu_custom_call.1} parent=1 // pred_fallthru
      _
    // Predicated region
    $region14: #{tpu_custom_call.1} parent=1 // pred_check
      _
    $region15: #{tpu_custom_call.1} parent=1 // pred_check_branch
      %54 = sbr.rel (0) target = $region17
    $region16: #{tpu_custom_call.1} parent=1 // pred_region
      _
    $region17: #{tpu_custom_call.1} parent=1 // pred_fallthru
      _
    // Predicated region
    $region18: #{tpu_custom_call.1} parent=1 // pred_check
      _
    $region19: #{tpu_custom_call.1} parent=1 // pred_check_branch
      %56 = sbr.rel (0) target = $region21
    $region20: #{tpu_custom_call.1} parent=1 // pred_region
      %s58 = ssub.s32 512, 512
      %59 = vsyncadd [#allocation9], %s58
      %s60 = sshll.u32 [#allocation8], 4
      %s61 = int_to_ptr.vmem [resolvable:$true] %s60
      %66 = dma.hbm_to_vmem [thread:$0]  %s4, 512, %s61, [#allocation9], 128, 128, 8
    $region21: #{tpu_custom_call.1} parent=1 // pred_fallthru
      _
    // Predicated region
    $region22: #{tpu_custom_call.1} parent=1 // pred_check
      _
    $region23: #{tpu_custom_call.1} parent=1 // pred_check_branch
      %68 = sbr.rel (0) target = $region25
    $region24: #{tpu_custom_call.1} parent=1 // pred_region
      _
    $region25: #{tpu_custom_call.1} parent=1 // pred_fallthru
      _
    // Predicated region
    $region26: #{tpu_custom_call.1} parent=1 // pred_check
      _
    $region27: #{tpu_custom_call.1} parent=1 // pred_check_branch
      %70 = sbr.rel (0) target = $region29
    $region28: #{tpu_custom_call.1} parent=1 // pred_region
      %s72 = ssub.s32 512, 512
      %73 = vsyncadd [#allocation9], %s72
      %s74 = sshll.u32 [#allocation10], 4
      %s75 = int_to_ptr.vmem [resolvable:$true] %s74
      %80 = dma.hbm_to_vmem [thread:$0]  %s6, 512, %s75, [#allocation9], 128, 128, 8
    $region29: #{tpu_custom_call.1} parent=1 // pred_fallthru
      _
    // Predicated region
    $region30: #{tpu_custom_call.1} parent=1 // pred_check
      _
    $region31: #{tpu_custom_call.1} parent=1 // pred_check_branch
      %82 = sbr.rel (0) target = $region33
    $region32: #{tpu_custom_call.1} parent=1 // pred_region
      _
    $region33: #{tpu_custom_call.1} parent=1 // pred_fallthru
      _
    // Predicated region
    $region34: #{tpu_custom_call.1} parent=1 // pred_check
      _
    $region35: #{tpu_custom_call.1} parent=1 // pred_check_branch
      %84 = sbr.rel (0) target = $region37
    $region36: #{tpu_custom_call.1} parent=1 // pred_region
      %85 = dma.done [#allocation3], 256
    $region37: #{tpu_custom_call.1} parent=1 // pred_fallthru
      _
    // Predicated region
    $region38: #{tpu_custom_call.1} parent=1 // pred_check
      _
    $region39: #{tpu_custom_call.1} parent=1 // pred_check_branch
      %87 = sbr.rel (0) target = $region41
    $region40: #{tpu_custom_call.1} parent=1 // pred_region
      %88 = dma.done [#allocation6], 256
    $region41: #{tpu_custom_call.1} parent=1 // pred_fallthru
      _
    // Predicated region
    $region42: #{tpu_custom_call.1} parent=1 // pred_check
      _
    $region43: #{tpu_custom_call.1} parent=1 // pred_check_branch
      %90 = sbr.rel (0) target = $region45
    $region44: #{tpu_custom_call.1} parent=1 // pred_region
      %91 = dma.done [#allocation6], 512
    $region45: #{tpu_custom_call.1} parent=1 // pred_fallthru
      _
    // Predicated region
    $region46: #{tpu_custom_call.1} parent=1 // pred_check
      _
    $region47: #{tpu_custom_call.1} parent=1 // pred_check_branch
      %93 = sbr.rel (0) target = $region49
    $region48: #{tpu_custom_call.1} parent=1 // pred_region
      %94 = dma.done [#allocation9], 512
    $region49: #{tpu_custom_call.1} parent=1 // pred_fallthru
      _
    // Predicated region
    $region50: #{tpu_custom_call.1} parent=1 // pred_check
      _
    $region51: #{tpu_custom_call.1} parent=1 // pred_check_branch
      %96 = sbr.rel (0) target = $region53
    $region52: #{tpu_custom_call.1} parent=1 // pred_region
      %97 = dma.done [#allocation9], 512
    $region53: #{tpu_custom_call.1} parent=1 // pred_fallthru
      _
    %v98 = vld [vmem:[#allocation2] sm:$0xff]
    %v99 = vld [vmem:[#allocation2 + $0x8] sm:$0xff]
    %v100 = vld [vmem:[#allocation7] sm:$0xff]
    %v101 = vld [vmem:[#allocation7 + $0x8] sm:$0xff]
    %v102 = vld [vmem:[#allocation7 + $0x10] sm:$0xff]
    %v103 = vld [vmem:[#allocation7 + $0x18] sm:$0xff]
    %v104 = vld [vmem:[%s3] sm:$0x1]
    %v106 = vlaneseq
    %v107 = vshrl.u32 %v106, 7
    %v108 = vsub.s32 0, %v107
    %v109 = vrot.slane %v104, %v108
    %vm111 = vcmask 261120
    %v113 = vsel %vm111, %v98, 0
    %v116 = vsel %vm111, %v99, 0
    %118 = vmatprep.subr.mxu0 0.0
    %119 = vmatpush1.msra.mxu0 0.0
    %120 = vmatprep.subr.mxu0 0.0
    %121 = vmatpush1.msra.mxu0 0.0
    %122 = vmatprep.subr.mxu0 0.0
    %123 = vmatpush1.msra.mxu0 0.0
    %124 = vmatprep.subr.mxu0 0.0
    %125 = vmatpush1.msra.mxu0 0.0
    %126 = vmatprep.subr.mxu0 0.0
    %127 = vmatpush1.msra.mxu0 0.0
    %128 = vmatprep.subr.mxu0 0.0
    %129 = vmatpush1.msra.mxu0 0.0
    %130 = vmatprep.subr.mxu0 0.0
    %131 = vmatpush1.msra.mxu0 0.0
    %132 = vmatprep.subr.mxu0 0.0
    %133 = vmatpush1.msra.mxu0 0.0
    %134 = vmatprep.subr.mxu0 0.0
    %135 = vmatpush1.msra.mxu0 0.0
    %136 = vmatprep.subr.mxu0 0.0
    %137 = vmatpush1.msra.mxu0 0.0
    %138 = vmatprep.subr.mxu0 0.0
    %139 = vmatpush1.msra.mxu0 0.0
    %140 = vmatprep.subr.mxu0 0.0
    %141 = vmatpush1.msra.mxu0 0.0
    %142 = vmatprep.subr.mxu0 0.0
    %143 = vmatpush1.msra.mxu0 %v103
    %144 = vmatprep.subr.mxu0 0.0
    %145 = vmatpush1.msra.mxu0 %v102
    %146 = vmatprep.subr.mxu0 0.0
    %147 = vmatpush1.msra.mxu0 %v101
    %148 = vmatprep.subr.mxu0 0.0
    %149 = vmatpush1.msra.mxu0 %v100
    %150 = vmatprep.subr.mxu0 0.0
    %151 = vmatpush2.msra.mxu0 0.0
    %152 = vmatprep.subr.mxu0 0.0
    %153 = vmatpush2.msra.mxu0 0.0
    %154 = vmatprep.subr.mxu0 0.0
    %155 = vmatpush2.msra.mxu0 0.0
    %156 = vmatprep.subr.mxu0 0.0
    %157 = vmatpush2.msra.mxu0 0.0
    %158 = vmatprep.subr.mxu0 0.0
    %159 = vmatpush2.msra.mxu0 0.0
    %160 = vmatprep.subr.mxu0 0.0
    %161 = vmatpush2.msra.mxu0 0.0
    %162 = vmatprep.subr.mxu0 0.0
    %163 = vmatpush2.msra.mxu0 0.0
    %164 = vmatprep.subr.mxu0 0.0
    %165 = vmatpush2.msra.mxu0 0.0
    %166 = vmatprep.subr.mxu0 0.0
    %167 = vmatpush2.msra.mxu0 0.0
    %168 = vmatprep.subr.mxu0 0.0
    %169 = vmatpush2.msra.mxu0 0.0
    %170 = vmatprep.subr.mxu0 0.0
    %171 = vmatpush2.msra.mxu0 0.0
    %172 = vmatprep.subr.mxu0 0.0
    %173 = vmatpush2.msra.mxu0 0.0
    %174 = vmatprep.subr.mxu0 0.0
    %175 = vmatpush2.msra.mxu0 0.0
    %176 = vmatprep.subr.mxu0 0.0
    %177 = vmatpush2.msra.mxu0 0.0
    %178 = vmatprep.subr.mxu0 0.0
    %179 = vmatpush2.msra.mxu0 0.0
    %180 = vmatprep.subr.mxu0 0.0
    %181 = vmatpush2.msra.mxu0 0.0
    %182 = vmatprep.mubr.f32.mxu0 0.0
    %183 = vmatmul.mubr.f32.gmra.mxu0 %v113
    %v184 = vpop.f32.mrf.mxu0
    %v185 = vadd.f32 %v109, %v184
    %v186 = vpop.f32.mrf.mxu0
    %187 = vmatprep.mubr.f32.mxu0 0.0
    %188 = vmatmul.mubr.f32.gmra.mxu0 %v116
    %v189 = vpop.f32.mrf.mxu0
    %v190 = vadd.f32 %v109, %v189
    %v191 = vpop.f32.mrf.mxu0
    %192 = vdwg.mxu0
    %v193 = vld [vmem:[#allocation8] sm:$0xff]
    %v194 = vld [vmem:[#allocation8 + $0x8] sm:$0xff]
    %v195 = vld [vmem:[#allocation8 + $0x10] sm:$0xff]
    %v196 = vld [vmem:[#allocation8 + $0x18] sm:$0xff]
    %v197 = vld [vmem:[%s5] sm:$0x1]
    %v199 = vlaneseq
    %v200 = vshrl.u32 %v199, 7
    %v201 = vsub.s32 0, %v200
    %v202 = vrot.slane %v197, %v201
    %204 = vmatprep.subr.mxu0 0.0
    %205 = vmatpush1.msra.mxu0 0.0
    %206 = vmatprep.subr.mxu0 0.0
    %207 = vmatpush1.msra.mxu0 0.0
    %208 = vmatprep.subr.mxu0 0.0
    %209 = vmatpush1.msra.mxu0 0.0
    %210 = vmatprep.subr.mxu0 0.0
    %211 = vmatpush1.msra.mxu0 0.0
    %212 = vmatprep.subr.mxu0 0.0
    %213 = vmatpush1.msra.mxu0 0.0
    %214 = vmatprep.subr.mxu0 0.0
    %215 = vmatpush1.msra.mxu0 0.0
    %216 = vmatprep.subr.mxu0 0.0
    %217 = vmatpush1.msra.mxu0 0.0
    %218 = vmatprep.subr.mxu0 0.0
    %219 = vmatpush1.msra.mxu0 0.0
    %220 = vmatprep.subr.mxu0 0.0
    %221 = vmatpush1.msra.mxu0 0.0
    %222 = vmatprep.subr.mxu0 0.0
    %223 = vmatpush1.msra.mxu0 0.0
    %224 = vmatprep.subr.mxu0 0.0
    %225 = vmatpush1.msra.mxu0 0.0
    %226 = vmatprep.subr.mxu0 0.0
    %227 = vmatpush1.msra.mxu0 0.0
    %228 = vmatprep.subr.mxu0 0.0
    %229 = vmatpush1.msra.mxu0 %v196
    %230 = vmatprep.subr.mxu0 0.0
    %231 = vmatpush1.msra.mxu0 %v195
    %232 = vmatprep.subr.mxu0 0.0
    %233 = vmatpush1.msra.mxu0 %v194
    %234 = vmatprep.subr.mxu0 0.0
    %235 = vmatpush1.msra.mxu0 %v193
    %236 = vmatprep.subr.mxu0 0.0
    %237 = vmatpush2.msra.mxu0 0.0
    %238 = vmatprep.subr.mxu0 0.0
    %239 = vmatpush2.msra.mxu0 0.0
    %240 = vmatprep.subr.mxu0 0.0
    %241 = vmatpush2.msra.mxu0 0.0
    %242 = vmatprep.subr.mxu0 0.0
    %243 = vmatpush2.msra.mxu0 0.0
    %244 = vmatprep.subr.mxu0 0.0
    %245 = vmatpush2.msra.mxu0 0.0
    %246 = vmatprep.subr.mxu0 0.0
    %247 = vmatpush2.msra.mxu0 0.0
    %248 = vmatprep.subr.mxu0 0.0
    %249 = vmatpush2.msra.mxu0 0.0
    %250 = vmatprep.subr.mxu0 0.0
    %251 = vmatpush2.msra.mxu0 0.0
    %252 = vmatprep.subr.mxu0 0.0
    %253 = vmatpush2.msra.mxu0 0.0
    %254 = vmatprep.subr.mxu0 0.0
    %255 = vmatpush2.msra.mxu0 0.0
    %256 = vmatprep.subr.mxu0 0.0
    %257 = vmatpush2.msra.mxu0 0.0
    %258 = vmatprep.subr.mxu0 0.0
    %259 = vmatpush2.msra.mxu0 0.0
    %260 = vmatprep.subr.mxu0 0.0
    %261 = vmatpush2.msra.mxu0 0.0
    %262 = vmatprep.subr.mxu0 0.0
    %263 = vmatpush2.msra.mxu0 0.0
    %264 = vmatprep.subr.mxu0 0.0
    %265 = vmatpush2.msra.mxu0 0.0
    %266 = vmatprep.subr.mxu0 0.0
    %267 = vmatpush2.msra.mxu0 0.0
    %268 = vmatprep.mubr.f32.mxu0 0.0
    %269 = vmatmul.mubr.f32.gmra.mxu0 %v113
    %v270 = vpop.f32.mrf.mxu0
    %v271 = vadd.f32 %v202, %v270
    %v272 = vpop.f32.mrf.mxu0
    %273 = vmatprep.mubr.f32.mxu0 0.0
    %274 = vmatmul.mubr.f32.gmra.mxu0 %v116
    %v275 = vpop.f32.mrf.mxu0
    %v276 = vadd.f32 %v202, %v275
    %v277 = vpop.f32.mrf.mxu0
    %278 = vdwg.mxu0
    %v279 = vld [vmem:[#allocation10] sm:$0xff]
    %v280 = vld [vmem:[#allocation10 + $0x8] sm:$0xff]
    %v281 = vld [vmem:[#allocation10 + $0x10] sm:$0xff]
    %v282 = vld [vmem:[#allocation10 + $0x18] sm:$0xff]
    %v283 = vld [vmem:[%s7] sm:$0x1]
    %v285 = vlaneseq
    %v286 = vshrl.u32 %v285, 7
    %v287 = vsub.s32 0, %v286
    %v288 = vrot.slane %v283, %v287
    %290 = vmatprep.subr.mxu0 0.0
    %291 = vmatpush1.msra.mxu0 0.0
    %292 = vmatprep.subr.mxu0 0.0
    %293 = vmatpush1.msra.mxu0 0.0
    %294 = vmatprep.subr.mxu0 0.0
    %295 = vmatpush1.msra.mxu0 0.0
    %296 = vmatprep.subr.mxu0 0.0
    %297 = vmatpush1.msra.mxu0 0.0
    %298 = vmatprep.subr.mxu0 0.0
    %299 = vmatpush1.msra.mxu0 0.0
    %300 = vmatprep.subr.mxu0 0.0
    %301 = vmatpush1.msra.mxu0 0.0
    %302 = vmatprep.subr.mxu0 0.0
    %303 = vmatpush1.msra.mxu0 0.0
    %304 = vmatprep.subr.mxu0 0.0
    %305 = vmatpush1.msra.mxu0 0.0
    %306 = vmatprep.subr.mxu0 0.0
    %307 = vmatpush1.msra.mxu0 0.0
    %308 = vmatprep.subr.mxu0 0.0
    %309 = vmatpush1.msra.mxu0 0.0
    %310 = vmatprep.subr.mxu0 0.0
    %311 = vmatpush1.msra.mxu0 0.0
    %312 = vmatprep.subr.mxu0 0.0
    %313 = vmatpush1.msra.mxu0 0.0
    %314 = vmatprep.subr.mxu0 0.0
    %315 = vmatpush1.msra.mxu0 %v282
    %316 = vmatprep.subr.mxu0 0.0
    %317 = vmatpush1.msra.mxu0 %v281
    %318 = vmatprep.subr.mxu0 0.0
    %319 = vmatpush1.msra.mxu0 %v280
    %320 = vmatprep.subr.mxu0 0.0
    %321 = vmatpush1.msra.mxu0 %v279
    %322 = vmatprep.subr.mxu0 0.0
    %323 = vmatpush2.msra.mxu0 0.0
    %324 = vmatprep.subr.mxu0 0.0
    %325 = vmatpush2.msra.mxu0 0.0
    %326 = vmatprep.subr.mxu0 0.0
    %327 = vmatpush2.msra.mxu0 0.0
    %328 = vmatprep.subr.mxu0 0.0
    %329 = vmatpush2.msra.mxu0 0.0
    %330 = vmatprep.subr.mxu0 0.0
    %331 = vmatpush2.msra.mxu0 0.0
    %332 = vmatprep.subr.mxu0 0.0
    %333 = vmatpush2.msra.mxu0 0.0
    %334 = vmatprep.subr.mxu0 0.0
    %335 = vmatpush2.msra.mxu0 0.0
    %336 = vmatprep.subr.mxu0 0.0
    %337 = vmatpush2.msra.mxu0 0.0
    %338 = vmatprep.subr.mxu0 0.0
    %339 = vmatpush2.msra.mxu0 0.0
    %340 = vmatprep.subr.mxu0 0.0
    %341 = vmatpush2.msra.mxu0 0.0
    %342 = vmatprep.subr.mxu0 0.0
    %343 = vmatpush2.msra.mxu0 0.0
    %344 = vmatprep.subr.mxu0 0.0
    %345 = vmatpush2.msra.mxu0 0.0
    %346 = vmatprep.subr.mxu0 0.0
    %347 = vmatpush2.msra.mxu0 0.0
    %348 = vmatprep.subr.mxu0 0.0
    %349 = vmatpush2.msra.mxu0 0.0
    %350 = vmatprep.subr.mxu0 0.0
    %351 = vmatpush2.msra.mxu0 0.0
    %352 = vmatprep.subr.mxu0 0.0
    %353 = vmatpush2.msra.mxu0 0.0
    %354 = vmatprep.mubr.f32.mxu0 0.0
    %355 = vmatmul.mubr.f32.gmra.mxu0 %v113
    %v356 = vpop.f32.mrf.mxu0
    %v357 = vadd.f32 %v288, %v356
    %v358 = vpop.f32.mrf.mxu0
    %359 = vmatprep.mubr.f32.mxu0 0.0
    %360 = vmatmul.mubr.f32.gmra.mxu0 %v116
    %v361 = vpop.f32.mrf.mxu0
    %v362 = vadd.f32 %v288, %v361
    %v363 = vpop.f32.mrf.mxu0
    %364 = vdwg.mxu0
    %v365 = vld [vmem:[#allocation5] sm:$0xff]
    %v366 = vld [vmem:[#allocation5 + $0x8] sm:$0xff]
    %v368 = vsel %vm111, %v185, 0
    %v371 = vsel %vm111, %v271, 0
    %373 = vmatprep.subr.mxu0 0.0
    %374 = vmatpush1.xpose.msra.mxu0 0.0
    %375 = vmatprep.subr.mxu0 0.0
    %376 = vmatpush1.xpose.msra.mxu0 0.0
    %377 = vmatprep.subr.mxu0 0.0
    %378 = vmatpush1.xpose.msra.mxu0 0.0
    %379 = vmatprep.subr.mxu0 0.0
    %380 = vmatpush1.xpose.msra.mxu0 0.0
    %381 = vmatprep.subr.mxu0 0.0
    %382 = vmatpush1.xpose.msra.mxu0 0.0
    %383 = vmatprep.subr.mxu0 0.0
    %384 = vmatpush1.xpose.msra.mxu0 0.0
    %385 = vmatprep.subr.mxu0 0.0
    %386 = vmatpush1.xpose.msra.mxu0 0.0
    %387 = vmatprep.subr.mxu0 0.0
    %388 = vmatpush1.xpose.msra.mxu0 0.0
    %389 = vmatprep.subr.mxu0 0.0
    %390 = vmatpush1.xpose.msra.mxu0 0.0
    %391 = vmatprep.subr.mxu0 0.0
    %392 = vmatpush1.xpose.msra.mxu0 0.0
    %393 = vmatprep.subr.mxu0 0.0
    %394 = vmatpush1.xpose.msra.mxu0 0.0
    %395 = vmatprep.subr.mxu0 0.0
    %396 = vmatpush1.xpose.msra.mxu0 0.0
    %397 = vmatprep.subr.mxu0 0.0
    %398 = vmatpush1.xpose.msra.mxu0 0.0
    %399 = vmatprep.subr.mxu0 0.0
    %400 = vmatpush1.xpose.msra.mxu0 0.0
    %401 = vmatprep.subr.mxu0 0.0
    %402 = vmatpush1.xpose.msra.mxu0 0.0
    %403 = vmatprep.subr.mxu0 0.0
    %404 = vmatpush1.xpose.msra.mxu0 %v371
    %405 = vmatprep.subr.mxu0 0.0
    %406 = vmatpush2.xpose.msra.mxu0 0.0
    %407 = vmatprep.subr.mxu0 0.0
    %408 = vmatpush2.xpose.msra.mxu0 0.0
    %409 = vmatprep.subr.mxu0 0.0
    %410 = vmatpush2.xpose.msra.mxu0 0.0
    %411 = vmatprep.subr.mxu0 0.0
    %412 = vmatpush2.xpose.msra.mxu0 0.0
    %413 = vmatprep.subr.mxu0 0.0
    %414 = vmatpush2.xpose.msra.mxu0 0.0
    %415 = vmatprep.subr.mxu0 0.0
    %416 = vmatpush2.xpose.msra.mxu0 0.0
    %417 = vmatprep.subr.mxu0 0.0
    %418 = vmatpush2.xpose.msra.mxu0 0.0
    %419 = vmatprep.subr.mxu0 0.0
    %420 = vmatpush2.xpose.msra.mxu0 0.0
    %421 = vmatprep.subr.mxu0 0.0
    %422 = vmatpush2.xpose.msra.mxu0 0.0
    %423 = vmatprep.subr.mxu0 0.0
    %424 = vmatpush2.xpose.msra.mxu0 0.0
    %425 = vmatprep.subr.mxu0 0.0
    %426 = vmatpush2.xpose.msra.mxu0 0.0
    %427 = vmatprep.subr.mxu0 0.0
    %428 = vmatpush2.xpose.msra.mxu0 0.0
    %429 = vmatprep.subr.mxu0 0.0
    %430 = vmatpush2.xpose.msra.mxu0 0.0
    %431 = vmatprep.subr.mxu0 0.0
    %432 = vmatpush2.xpose.msra.mxu0 0.0
    %433 = vmatprep.subr.mxu0 0.0
    %434 = vmatpush2.xpose.msra.mxu0 0.0
    %435 = vmatprep.subr.mxu0 0.0
    %436 = vmatpush2.xpose.msra.mxu0 0.0
    %437 = vmatprep.mubr.f32.mxu0 0.0
    %438 = vmatmul.mubr.f32.gmra.mxu0 %v368
    %v439 = vpop.f32.mrf.mxu0
    %v440 = vadd.f32 0.0, %v439
    %v441 = vpop.f32.mrf.mxu0
    %442 = vdwg.mxu0
    %v444 = vsel %vm111, %v190, 0
    %v447 = vsel %vm111, %v276, 0
    %449 = vmatprep.subr.mxu0 0.0
    %450 = vmatpush1.xpose.msra.mxu0 0.0
    %451 = vmatprep.subr.mxu0 0.0
    %452 = vmatpush1.xpose.msra.mxu0 0.0
    %453 = vmatprep.subr.mxu0 0.0
    %454 = vmatpush1.xpose.msra.mxu0 0.0
    %455 = vmatprep.subr.mxu0 0.0
    %456 = vmatpush1.xpose.msra.mxu0 0.0
    %457 = vmatprep.subr.mxu0 0.0
    %458 = vmatpush1.xpose.msra.mxu0 0.0
    %459 = vmatprep.subr.mxu0 0.0
    %460 = vmatpush1.xpose.msra.mxu0 0.0
    %461 = vmatprep.subr.mxu0 0.0
    %462 = vmatpush1.xpose.msra.mxu0 0.0
    %463 = vmatprep.subr.mxu0 0.0
    %464 = vmatpush1.xpose.msra.mxu0 0.0
    %465 = vmatprep.subr.mxu0 0.0
    %466 = vmatpush1.xpose.msra.mxu0 0.0
    %467 = vmatprep.subr.mxu0 0.0
    %468 = vmatpush1.xpose.msra.mxu0 0.0
    %469 = vmatprep.subr.mxu0 0.0
    %470 = vmatpush1.xpose.msra.mxu0 0.0
    %471 = vmatprep.subr.mxu0 0.0
    %472 = vmatpush1.xpose.msra.mxu0 0.0
    %473 = vmatprep.subr.mxu0 0.0
    %474 = vmatpush1.xpose.msra.mxu0 0.0
    %475 = vmatprep.subr.mxu0 0.0
    %476 = vmatpush1.xpose.msra.mxu0 0.0
    %477 = vmatprep.subr.mxu0 0.0
    %478 = vmatpush1.xpose.msra.mxu0 0.0
    %479 = vmatprep.subr.mxu0 0.0
    %480 = vmatpush1.xpose.msra.mxu0 %v447
    %481 = vmatprep.subr.mxu0 0.0
    %482 = vmatpush2.xpose.msra.mxu0 0.0
    %483 = vmatprep.subr.mxu0 0.0
    %484 = vmatpush2.xpose.msra.mxu0 0.0
    %485 = vmatprep.subr.mxu0 0.0
    %486 = vmatpush2.xpose.msra.mxu0 0.0
    %487 = vmatprep.subr.mxu0 0.0
    %488 = vmatpush2.xpose.msra.mxu0 0.0
    %489 = vmatprep.subr.mxu0 0.0
    %490 = vmatpush2.xpose.msra.mxu0 0.0
    %491 = vmatprep.subr.mxu0 0.0
    %492 = vmatpush2.xpose.msra.mxu0 0.0
    %493 = vmatprep.subr.mxu0 0.0
    %494 = vmatpush2.xpose.msra.mxu0 0.0
    %495 = vmatprep.subr.mxu0 0.0
    %496 = vmatpush2.xpose.msra.mxu0 0.0
    %497 = vmatprep.subr.mxu0 0.0
    %498 = vmatpush2.xpose.msra.mxu0 0.0
    %499 = vmatprep.subr.mxu0 0.0
    %500 = vmatpush2.xpose.msra.mxu0 0.0
    %501 = vmatprep.subr.mxu0 0.0
    %502 = vmatpush2.xpose.msra.mxu0 0.0
    %503 = vmatprep.subr.mxu0 0.0
    %504 = vmatpush2.xpose.msra.mxu0 0.0
    %505 = vmatprep.subr.mxu0 0.0
    %506 = vmatpush2.xpose.msra.mxu0 0.0
    %507 = vmatprep.subr.mxu0 0.0
    %508 = vmatpush2.xpose.msra.mxu0 0.0
    %509 = vmatprep.subr.mxu0 0.0
    %510 = vmatpush2.xpose.msra.mxu0 0.0
    %511 = vmatprep.subr.mxu0 0.0
    %512 = vmatpush2.xpose.msra.mxu0 0.0
    %513 = vmatprep.mubr.f32.mxu0 0.0
    %514 = vmatmul.mubr.f32.gmra.mxu0 %v444
    %v515 = vpop.f32.mrf.mxu0
    %v516 = vadd.f32 0.0, %v515
    %v517 = vpop.f32.mrf.mxu0
    %518 = vdwg.mxu0
    %vm519 = vcmp.ne.s32.totalorder %v365, 0
    %vm520 = vcmp.ne.s32.totalorder %v366, 0
    %v521 = vsel %vm519, %v440, -1e+30
    %v522 = vsel %vm520, %v516, -1e+30
    %vm523 = vcmask 64512
    %v524 = vsel %vm523, %v521, -inf
    %525 = vmax.xlane.f32.xlu0 %v524
    %v526 = vpop.xlane.xlu0 %525
    %v527 = vsel %vm523, %v522, -inf
    %528 = vmax.xlane.f32.xlu0 %v527
    %v529 = vpop.xlane.xlu0 %528
    %v530 = vsub.f32 %v521, %v526
    %v531 = vsub.f32 %v522, %v529
    %v532 = vmul.f32 %v530, 1.442695
    %v533 = vpow.pop %v532
    %v534 = vmul.f32 %v531, 1.442695
    %v535 = vpow.pop %v534
    %v536 = vsel %vm523, %v533, 0.0
    %537 = vadd.xlane.f32.xlu0 %v536
    %v538 = vpop.xlane.xlu0 %537
    %v539 = vsel %vm523, %v535, 0.0
    %540 = vadd.xlane.f32.xlu0 %v539
    %v541 = vpop.xlane.xlu0 %540
    %v542 = vrcp.pop %v538
    %v543 = vrcp.pop %v541
    %v544 = vmul.f32 %v533, %v542
    %v545 = vmul.f32 %v535, %v543
    %v547 = vsel %vm523, %v544, 0
    %549 = vmatprep.subr.mxu0 0.0
    %550 = vmatpush1.msra.mxu0 0.0
    %551 = vmatprep.subr.mxu0 0.0
    %552 = vmatpush1.msra.mxu0 0.0
    %553 = vmatprep.subr.mxu0 0.0
    %554 = vmatpush1.msra.mxu0 0.0
    %555 = vmatprep.subr.mxu0 0.0
    %556 = vmatpush1.msra.mxu0 0.0
    %557 = vmatprep.subr.mxu0 0.0
    %558 = vmatpush1.msra.mxu0 0.0
    %559 = vmatprep.subr.mxu0 0.0
    %560 = vmatpush1.msra.mxu0 0.0
    %561 = vmatprep.subr.mxu0 0.0
    %562 = vmatpush1.msra.mxu0 0.0
    %563 = vmatprep.subr.mxu0 0.0
    %564 = vmatpush1.msra.mxu0 0.0
    %565 = vmatprep.subr.mxu0 0.0
    %566 = vmatpush1.msra.mxu0 0.0
    %567 = vmatprep.subr.mxu0 0.0
    %568 = vmatpush1.msra.mxu0 0.0
    %569 = vmatprep.subr.mxu0 0.0
    %570 = vmatpush1.msra.mxu0 0.0
    %571 = vmatprep.subr.mxu0 0.0
    %572 = vmatpush1.msra.mxu0 0.0
    %573 = vmatprep.subr.mxu0 0.0
    %574 = vmatpush1.msra.mxu0 0.0
    %575 = vmatprep.subr.mxu0 0.0
    %576 = vmatpush1.msra.mxu0 0.0
    %577 = vmatprep.subr.mxu0 0.0
    %578 = vmatpush1.msra.mxu0 0.0
    %579 = vmatprep.subr.mxu0 0.0
    %580 = vmatpush1.msra.mxu0 %v357
    %581 = vmatprep.subr.mxu0 0.0
    %582 = vmatpush2.msra.mxu0 0.0
    %583 = vmatprep.subr.mxu0 0.0
    %584 = vmatpush2.msra.mxu0 0.0
    %585 = vmatprep.subr.mxu0 0.0
    %586 = vmatpush2.msra.mxu0 0.0
    %587 = vmatprep.subr.mxu0 0.0
    %588 = vmatpush2.msra.mxu0 0.0
    %589 = vmatprep.subr.mxu0 0.0
    %590 = vmatpush2.msra.mxu0 0.0
    %591 = vmatprep.subr.mxu0 0.0
    %592 = vmatpush2.msra.mxu0 0.0
    %593 = vmatprep.subr.mxu0 0.0
    %594 = vmatpush2.msra.mxu0 0.0
    %595 = vmatprep.subr.mxu0 0.0
    %596 = vmatpush2.msra.mxu0 0.0
    %597 = vmatprep.subr.mxu0 0.0
    %598 = vmatpush2.msra.mxu0 0.0
    %599 = vmatprep.subr.mxu0 0.0
    %600 = vmatpush2.msra.mxu0 0.0
    %601 = vmatprep.subr.mxu0 0.0
    %602 = vmatpush2.msra.mxu0 0.0
    %603 = vmatprep.subr.mxu0 0.0
    %604 = vmatpush2.msra.mxu0 0.0
    %605 = vmatprep.subr.mxu0 0.0
    %606 = vmatpush2.msra.mxu0 0.0
    %607 = vmatprep.subr.mxu0 0.0
    %608 = vmatpush2.msra.mxu0 0.0
    %609 = vmatprep.subr.mxu0 0.0
    %610 = vmatpush2.msra.mxu0 0.0
    %611 = vmatprep.subr.mxu0 0.0
    %612 = vmatpush2.msra.mxu0 0.0
    %613 = vmatprep.mubr.f32.mxu0 0.0
    %614 = vmatmul.mubr.f32.gmra.mxu0 %v547
    %v615 = vpop.f32.mrf.mxu0
    %v616 = vadd.f32 0.0, %v615
    %v617 = vpop.f32.mrf.mxu0
    %618 = vdwg.mxu0
    %v620 = vsel %vm523, %v545, 0
    %622 = vmatprep.subr.mxu0 0.0
    %623 = vmatpush1.msra.mxu0 0.0
    %624 = vmatprep.subr.mxu0 0.0
    %625 = vmatpush1.msra.mxu0 0.0
    %626 = vmatprep.subr.mxu0 0.0
    %627 = vmatpush1.msra.mxu0 0.0
    %628 = vmatprep.subr.mxu0 0.0
    %629 = vmatpush1.msra.mxu0 0.0
    %630 = vmatprep.subr.mxu0 0.0
    %631 = vmatpush1.msra.mxu0 0.0
    %632 = vmatprep.subr.mxu0 0.0
    %633 = vmatpush1.msra.mxu0 0.0
    %634 = vmatprep.subr.mxu0 0.0
    %635 = vmatpush1.msra.mxu0 0.0
    %636 = vmatprep.subr.mxu0 0.0
    %637 = vmatpush1.msra.mxu0 0.0
    %638 = vmatprep.subr.mxu0 0.0
    %639 = vmatpush1.msra.mxu0 0.0
    %640 = vmatprep.subr.mxu0 0.0
    %641 = vmatpush1.msra.mxu0 0.0
    %642 = vmatprep.subr.mxu0 0.0
    %643 = vmatpush1.msra.mxu0 0.0
    %644 = vmatprep.subr.mxu0 0.0
    %645 = vmatpush1.msra.mxu0 0.0
    %646 = vmatprep.subr.mxu0 0.0
    %647 = vmatpush1.msra.mxu0 0.0
    %648 = vmatprep.subr.mxu0 0.0
    %649 = vmatpush1.msra.mxu0 0.0
    %650 = vmatprep.subr.mxu0 0.0
    %651 = vmatpush1.msra.mxu0 0.0
    %652 = vmatprep.subr.mxu0 0.0
    %653 = vmatpush1.msra.mxu0 %v362
    %654 = vmatprep.subr.mxu0 0.0
    %655 = vmatpush2.msra.mxu0 0.0
    %656 = vmatprep.subr.mxu0 0.0
    %657 = vmatpush2.msra.mxu0 0.0
    %658 = vmatprep.subr.mxu0 0.0
    %659 = vmatpush2.msra.mxu0 0.0
    %660 = vmatprep.subr.mxu0 0.0
    %661 = vmatpush2.msra.mxu0 0.0
    %662 = vmatprep.subr.mxu0 0.0
    %663 = vmatpush2.msra.mxu0 0.0
    %664 = vmatprep.subr.mxu0 0.0
    %665 = vmatpush2.msra.mxu0 0.0
    %666 = vmatprep.subr.mxu0 0.0
    %667 = vmatpush2.msra.mxu0 0.0
    %668 = vmatprep.subr.mxu0 0.0
    %669 = vmatpush2.msra.mxu0 0.0
    %670 = vmatprep.subr.mxu0 0.0
    %671 = vmatpush2.msra.mxu0 0.0
    %672 = vmatprep.subr.mxu0 0.0
    %673 = vmatpush2.msra.mxu0 0.0
    %674 = vmatprep.subr.mxu0 0.0
    %675 = vmatpush2.msra.mxu0 0.0
    %676 = vmatprep.subr.mxu0 0.0
    %677 = vmatpush2.msra.mxu0 0.0
    %678 = vmatprep.subr.mxu0 0.0
    %679 = vmatpush2.msra.mxu0 0.0
    %680 = vmatprep.subr.mxu0 0.0
    %681 = vmatpush2.msra.mxu0 0.0
    %682 = vmatprep.subr.mxu0 0.0
    %683 = vmatpush2.msra.mxu0 0.0
    %684 = vmatprep.subr.mxu0 0.0
    %685 = vmatpush2.msra.mxu0 0.0
    %686 = vmatprep.mubr.f32.mxu0 0.0
    %687 = vmatmul.mubr.f32.gmra.mxu0 %v620
    %v688 = vpop.f32.mrf.mxu0
    %v689 = vadd.f32 0.0, %v688
    %v690 = vpop.f32.mrf.mxu0
    %691 = vdwg.mxu0
    %v692 = vcombine.high %v616, 0.0
    %v694 = vunpack.c.l.s4 1983009808
    %v695 = vunpack.c.0.s8 %v694
    %v696 = vlaneseq
    %v697 = vshrl.u32 %v696, 7
    %v698 = vsub.s32 %v695, %v697
    %v699 = vrot.slane %v616, %v698
    %v701 = vunpack.c.l.s4 1983009808
    %v702 = vunpack.c.0.s8 %v701
    %v703 = vlaneseq
    %v704 = vshrl.u32 %v703, 7
    %v705 = vsub.s32 %v702, %v704
    %v706 = vrot.slane %v692, %v705
    %v707 = vcombine.high %v689, 0.0
    %v709 = vunpack.c.l.s4 1983009808
    %v710 = vunpack.c.0.s8 %v709
    %v711 = vlaneseq
    %v712 = vshrl.u32 %v711, 7
    %v713 = vsub.s32 %v710, %v712
    %v714 = vrot.slane %v689, %v713
    %v716 = vunpack.c.l.s4 1983009808
    %v717 = vunpack.c.0.s8 %v716
    %v718 = vlaneseq
    %v719 = vshrl.u32 %v718, 7
    %v720 = vsub.s32 %v717, %v719
    %v721 = vrot.slane %v707, %v720
    %v722 = vcombine.low %v699, %v714
    %v723 = vcombine.high %v699, %v714
    %v725 = vunpack.c.l.s4 1934713408
    %v726 = vunpack.c.0.s8 %v725
    %v727 = vlaneseq
    %v728 = vshrl.u32 %v727, 7
    %v729 = vsub.s32 %v726, %v728
    %v730 = vrot.slane %v722, %v729
    %v732 = vunpack.c.l.s4 1934713408
    %v733 = vunpack.c.0.s8 %v732
    %v734 = vlaneseq
    %v735 = vshrl.u32 %v734, 7
    %v736 = vsub.s32 %v733, %v735
    %v737 = vrot.slane %v723, %v736
    %v738 = vcombine.low %v706, %v721
    %v739 = vcombine.high %v706, %v721
    %v741 = vunpack.c.l.s4 1934713408
    %v742 = vunpack.c.0.s8 %v741
    %v743 = vlaneseq
    %v744 = vshrl.u32 %v743, 7
    %v745 = vsub.s32 %v742, %v744
    %v746 = vrot.slane %v738, %v745
    %v748 = vunpack.c.l.s4 1934713408
    %v749 = vunpack.c.0.s8 %v748
    %v750 = vlaneseq
    %v751 = vshrl.u32 %v750, 7
    %v752 = vsub.s32 %v749, %v751
    %v753 = vrot.slane %v739, %v752
    %v754 = vcombine.high %v730, 0.0
    %v755 = vcombine.high %v737, 0.0
    %v756 = vcombine.high %v746, 0.0
    %v757 = vcombine.high %v753, 0.0
    %759 = vrot.lane.b32.xlu0 %v754, 32
    %v760 = vpop.permute.xlu0 %759
    %763 = vrot.lane.b32.xlu0 %v737, 64
    %v764 = vpop.permute.xlu0 %763
    %767 = vrot.lane.b32.xlu0 %v755, 96
    %v768 = vpop.permute.xlu0 %767
    %771 = vrot.lane.b32.xlu0 %v756, 32
    %v772 = vpop.permute.xlu0 %771
    %775 = vrot.lane.b32.xlu0 %v753, 64
    %v776 = vpop.permute.xlu0 %775
    %779 = vrot.lane.b32.xlu0 %v757, 96
    %v780 = vpop.permute.xlu0 %779
    %v782 = vsel %vm111, %v730, %v760
    %vm783 = vcmask 523264
    %v784 = vsel %vm783, %v782, %v764
    %vm785 = vcmask 785408
    %v786 = vsel %vm785, %v784, %v768
    %v787 = vsel %vm111, %v746, %v772
    %v788 = vsel %vm783, %v787, %v776
    %v789 = vsel %vm785, %v788, %v780
    %v792 = vcombine.low %v786, %v789
    %v794 = vunpack.c.l.s4 1983009808
    %v795 = vunpack.c.0.s8 %v794
    %v796 = vlaneseq
    %v797 = vshrl.u32 %v796, 7
    %v798 = vsub.s32 %v795, %v797
    %v799 = vrot.slane %v792, %v798
    %801 = vst [vmem:[#allocation11] sm:$0xf] %v799
    // Predicated region
    $region54: #{tpu_custom_call.1} parent=1 // pred_check
      _
    $region55: #{tpu_custom_call.1} parent=1 // pred_check_branch
      %803 = sbr.rel (0) target = $region57
    $region56: #{tpu_custom_call.1} parent=1 // pred_region
      %s805 = ssub.s32 64, 64
      %806 = vsyncadd [#allocation4], %s805
      %s808 = sshll.u32 [#allocation11], 4
      %s809 = int_to_ptr.vmem [resolvable:$true] %s808
      %811 = dma.vmem_to_hbm [thread:$0]  %s809, 64, %s8, [#allocation4]
    $region57: #{tpu_custom_call.1} parent=1 // pred_fallthru
      _
    // Predicated region
    $region58: #{tpu_custom_call.1} parent=1 // pred_check
      _
    $region59: #{tpu_custom_call.1} parent=1 // pred_check_branch
      %813 = sbr.rel (0) target = $region61
    $region60: #{tpu_custom_call.1} parent=1 // pred_region
      %814 = dma.done [#allocation4], 64
    $region61: #{tpu_custom_call.1} parent=1 // pred_fallthru
      _
    %815 = vsyncpa [#allocation3], 1
    %816 = vsyncpa [#allocation6], 1
    %817 = vsyncpa [#allocation9], 1
    %818 = vsyncpa [#allocation4], 1

</llo_original>
